<compile_context>
chip_gen: v7x
topology: tpu7x:2x2x1
jax: 0.10.0
libtpu: 0.0.40
codegen_flags: <defaults>
</compile_context>

<pallas_src>
import jax
import jax.numpy as jnp
from jax.experimental import pallas as pl
from jax.experimental.pallas import tpu as pltpu


def _round_up(x, m):
    return ((x + m - 1) // m) * m


# ---------------------------------------------------------------------------
# Pallas kernel: TB batch elements per grid step.
# ---------------------------------------------------------------------------
def attention_kernel(rev_ref,      # (TB*Lp, K) bf16  -- flattened review tile
                     idp_ref,      # (TB, D)    f32   -- idx_emb @ Wi^T + br
                     maskb_ref,    # (TB, Lp)   f32   -- additive mask bias (+ bh)
                     w_rev_t_ref,  # (K, D)     bf16  -- w_review^T
                     w_h_ref,      # (1, D)     f32   -- h weight row
                     out_ref):     # (TB, K)    f32
    tb, lp = maskb_ref.shape
    kk = rev_ref.shape[-1]
    d = idp_ref.shape[-1]

    rev2d = rev_ref[...]                                           # (tb*lp, K) bf16

    # w_review(review): one big MXU matmul, M = tb*lp, bf16 in / f32 accumulate.
    proj = jnp.dot(rev2d, w_rev_t_ref[...],
                   preferred_element_type=jnp.float32)             # (tb*lp, D) f32

    # relu(proj + per-batch bias). (tb*lp, D) -> (tb, lp, D) is a free f32
    # sublane split because lp % 8 == 0 (enforced by the wrapper).
    s = jnp.maximum(proj.reshape(tb, lp, d) + idp_ref[...][:, None, :], 0.0)

    # h(s): VPU multiply + lane reduce (no degenerate N=1 MXU matmul).
    score = jnp.sum(s * w_h_ref[...].reshape(1, 1, d), axis=-1)    # (tb, lp) f32
    # additive bias already contains h_b and -1e10 for masked / padded slots.
    score = score + maskb_ref[...]

    # numerically stable softmax over L (EUP exp + approx reciprocal).
    m = jnp.max(score, axis=-1, keepdims=True)
    e = jnp.exp(score - m)
    attn = e * pl.reciprocal(jnp.sum(e, axis=-1, keepdims=True), approx=True)

    # Weighted sum over L, accumulated in f32 (upcast: v5e VPU has no bf16).
    # (tb*lp, K) -> (tb, lp, K) is again a free f32 sublane split.
    # TODO(synk): for very large L, block this reduction over L-chunks instead
    # of materializing the full (tb, lp, K) broadcast temporary.
    rev_f32 = rev2d.astype(jnp.float32).reshape(tb, lp, kk)
    out_ref[...] = jnp.sum(rev_f32 * attn[:, :, None], axis=1)     # (tb, K)


# ---------------------------------------------------------------------------
# Tile sizing helpers (per-generation VMEM budget, >=2 even grid steps).
# ---------------------------------------------------------------------------
def _vmem_params():
    try:
        cap = int(pltpu.get_tpu_info().vmem_capacity_bytes)
    except Exception:
        cap = 64 * 1024 * 1024          # assume smallest generation (v7x: 64 MiB/TC)
    budget = min(cap // 3, 40 * 1024 * 1024)   # tile-sizing budget
    limit = min(cap // 2, 100 * 1024 * 1024)   # scoped VMEM limit for Mosaic
    return budget, limit


def _choose_batch_tile(B, Lp, K, D, budget, max_tile=256):
    """Largest TB (multiple of 8, <= B) fitting the VMEM budget, >= 2 even steps."""
    if B < 8:
        return B                         # single full-array block, no alignment needs
    Kl = _round_up(K, 128)
    Dl = _round_up(D, 128)
    per_elem = (2 * 2 * Lp * Kl * 2      # bf16 review tile, double-buffered
                + 3 * Lp * Kl * 4        # f32 upcast + weighted-sum temporaries
                + 2 * Lp * Dl * 4        # projection / relu intermediates
                + 16 * Kl * 4)           # idp / mask-bias / score / output slabs
    cap = min(max_tile, max(8, budget // per_elem))
    cap = max(8, (cap // 8) * 8)
    n = max(2, pl.cdiv(B, cap))          # >=2 steps: megacore on v7x + DMA overlap
    if n % 2:
        n += 1                           # even split across v7x's 2 TensorCores
    tb = _round_up(pl.cdiv(B, n), 8)
    return max(8, min(tb, cap, (B // 8) * 8))


# ---------------------------------------------------------------------------
# Wrapper.
# ---------------------------------------------------------------------------
def hrfa_attention(review, idx, mask, params):
    """review: (B, L, K) f32, idx: (B, 1) i32, mask: (B, L) bool -> (B, K) f32."""
    B, L, K = review.shape
    D = params["w_id"].shape[0]

    # ---- JAX glue: embedding gather + hoisted tiny projections -------------
    idx_emb = jnp.take(params["id_embedding"], idx[:, 0], axis=0)          # (B, D)
    idp = (jnp.dot(idx_emb, params["w_id"].T)
           + params["w_review_b"]).astype(jnp.float32)                     # (B, D)

    # Pad L once to a multiple of 8 (sublane axis) so in-kernel f32 reshapes
    # are free re-views; padded positions are masked out.  No-op for L % 8 == 0.
    Lp = _round_up(L, 8)
    if Lp != L:
        review = jnp.pad(review, ((0, 0), (0, Lp - L), (0, 0)))
        mask = jnp.pad(mask, ((0, 0), (0, Lp - L)), constant_values=True)

    # Mask folded into an additive bias; h bias folded in as well.
    mask_bias = (jnp.where(mask, jnp.float32(-1e10), jnp.float32(0.0))
                 + params["h_b"][0].astype(jnp.float32))                   # (B, Lp)

    # bf16 for the HBM-dominant operand and the matmul weight (f32 accumulate).
    # TODO(synk): in a real pipeline the upstream CNN should emit bf16 directly
    # so this cast fuses with the producer instead of being a separate pass.
    rev2d = review.astype(jnp.bfloat16).reshape(B * Lp, K)                 # (B*Lp, K)
    w_rev_t = params["w_review_w"].T.astype(jnp.bfloat16)                  # (K, D)
    w_h = params["h_w"].reshape(1, D).astype(jnp.float32)                  # (1, D)

    budget, vmem_limit = _vmem_params()
    TB = _choose_batch_tile(B, Lp, K, D, budget)
    n_steps = pl.cdiv(B, TB)

    cost = pl.CostEstimate(
        flops=int(2 * B * Lp * K * (D + 1)),
        transcendentals=int(B * Lp),
        bytes_accessed=int(B * Lp * K * 2 + B * K * 4 + B * (D + Lp) * 4
                           + K * D * 2 + D * 4))

    out = pl.pallas_call(
        attention_kernel,
        out_shape=jax.ShapeDtypeStruct((B, K), jnp.float32),
        grid_spec=pltpu.PrefetchScalarGridSpec(
            num_scalar_prefetch=0,
            grid=(n_steps,),
            in_specs=[
                pl.BlockSpec((TB * Lp, K), lambda b: (b, 0)),   # review (bf16)
                pl.BlockSpec((TB, D), lambda b: (b, 0)),        # idx proj + bias
                pl.BlockSpec((TB, Lp), lambda b: (b, 0)),       # mask bias (+ h_b)
                pl.BlockSpec((K, D), lambda b: (0, 0)),         # w_review^T (bf16)
                pl.BlockSpec((1, D), lambda b: (0, 0)),         # h weight row
            ],
            out_specs=pl.BlockSpec((TB, K), lambda b: (b, 0)),
        ),
        compiler_params=pltpu.CompilerParams(
            dimension_semantics=("parallel",),
            vmem_limit_bytes=vmem_limit),
        cost_estimate=cost,
    )(rev2d, idp, mask_bias, w_rev_t, w_h)

    return out


# ---------------------------------------------------------------------------
# Pure-JAX reference (mirrors the PyTorch forward, eval-mode dropout).
# ---------------------------------------------------------------------------
def hrfa_attention_ref(review, idx, mask, params):
    idx_emb = jnp.take(params["id_embedding"], idx[:, 0], axis=0)     # (B, D)
    proj = jnp.einsum("blk,dk->bld", review, params["w_review_w"]) + params["w_review_b"]
    idp = jnp.einsum("bd,ed->be", idx_emb, params["w_id"])            # (B, D)
    s = jax.nn.relu(proj + idp[:, None, :])
    score = jnp.einsum("bld,od->blo", s, params["h_w"])[..., 0] + params["h_b"][0]
    score = jnp.where(mask, -1e10, score)
    score = jax.nn.softmax(score, axis=1)
    return jnp.einsum("bl,blk->bk", score, review)


# ---------------------------------------------------------------------------
# Deterministic parameter init (synthetic, not a checkpoint load).
# ---------------------------------------------------------------------------
def init_params(key, id_count, kernel_num, id_dim, pad_id=0):
    ks = jax.random.split(key, 6)
    emb = jax.random.normal(ks[0], (id_count, id_dim), jnp.float32)
    emb = emb.at[pad_id].set(0.0)                      # padding_idx row = 0
    lim_r = 1.0 / jnp.sqrt(kernel_num)
    lim_d = 1.0 / jnp.sqrt(id_dim)
    return {
        "id_embedding": emb,
        "w_review_w": jax.random.uniform(ks[1], (id_dim, kernel_num), jnp.float32, -lim_r, lim_r),
        "w_review_b": jax.random.uniform(ks[2], (id_dim,), jnp.float32, -lim_r, lim_r),
        "w_id":       jax.random.uniform(ks[3], (id_dim, id_dim), jnp.float32, -lim_d, lim_d),
        "h_w":        jax.random.uniform(ks[4], (1, id_dim), jnp.float32, -lim_d, lim_d),
        "h_b":        jax.random.uniform(ks[5], (1,), jnp.float32, -lim_d, lim_d),
    }


if __name__ == "__main__":
    # Small shapes consistent with HrfaConfig: kernel_num=100, id_dim=32.
    B, L, K, D = 2, 8, 100, 32
    id_count, pad_id = 16, 0

    key = jax.random.PRNGKey(0)
    k_p, k_rev, k_idx, k_mask = jax.random.split(key, 4)

    params = init_params(k_p, id_count, K, D, pad_id)
    review = jax.random.normal(k_rev, (B, L, K), jnp.float32)
    idx = jax.random.randint(k_idx, (B, 1), 1, id_count, jnp.int32)
    mask = jax.random.bernoulli(k_mask, 0.3, (B, L))
    mask = mask.at[:, 0].set(False)                   # keep >=1 unmasked position

    out = hrfa_attention(review, idx, mask, params)
    out = jax.block_until_ready(out)
    assert out.shape == (B, K)

    # (1) bf16-consistent reference: same rounding of review / w_review as the
    #     kernel; residual error is accumulation order + approx reciprocal.
    params_bf = dict(params)
    params_bf["w_review_w"] = params["w_review_w"].astype(jnp.bfloat16).astype(jnp.float32)
    review_bf = review.astype(jnp.bfloat16).astype(jnp.float32)
    ref_bf = hrfa_attention_ref(review_bf, idx, mask, params_bf)
    assert jnp.allclose(out, ref_bf, atol=3e-3, rtol=3e-3), "mismatch vs bf16-consistent reference"

    # (2) exact f32 reference: looser tolerance covers bf16 storage of review.
    ref_f32 = hrfa_attention_ref(review, idx, mask, params)
    assert jnp.allclose(out, ref_f32, atol=5e-2, rtol=5e-2), "mismatch vs f32 reference"

    print("KERNEL_OK")
</pallas_src>

<mosaic_0001>
module attributes {stable_mosaic.version = 11 : i64} {
  func.func @attention_kernel(%arg0: i32, %arg1: memref<16x100xbf16, #tpu.memory_space<vmem>>, %arg2: memref<2x32xf32, #tpu.memory_space<vmem>>, %arg3: memref<2x8xf32, #tpu.memory_space<vmem>>, %arg4: memref<100x32xbf16, #tpu.memory_space<vmem>>, %arg5: memref<1x32xf32, #tpu.memory_space<vmem>>, %arg6: memref<2x100xf32, #tpu.memory_space<vmem>>) attributes {dimension_semantics = [#tpu.dimension_semantics<parallel>], iteration_bounds = array<i64: 1>, scalar_prefetch = 0 : i64, scratch_operands = 0 : i64, tpu.core_type = #tpu.core_type<tc>, window_params = [{transform_indices = @transform_0, window_bounds = array<i64: 16, 100>}, {transform_indices = @transform_1, window_bounds = array<i64: 2, 32>}, {transform_indices = @transform_2, window_bounds = array<i64: 2, 8>}, {pipeline_mode = #tpu.pipeline_mode<synchronous>, transform_indices = @transform_3, window_bounds = array<i64: 100, 32>}, {pipeline_mode = #tpu.pipeline_mode<synchronous>, transform_indices = @transform_4, window_bounds = array<i64: 1, 32>}, {transform_indices = @transform_5, window_bounds = array<i64: 2, 100>}]} {
    %c0 = arith.constant 0 : index
    %c0_0 = arith.constant 0 : index
    %0 = vector.load %arg1[%c0, %c0_0] : memref<16x100xbf16, #tpu.memory_space<vmem>>, vector<16x100xbf16>
    %c0_1 = arith.constant 0 : index
    %c0_2 = arith.constant 0 : index
    %1 = vector.load %arg4[%c0_1, %c0_2] : memref<100x32xbf16, #tpu.memory_space<vmem>>, vector<100x32xbf16>
    %cst = arith.constant dense<0.000000e+00> : vector<16x32xf32>
    %2 = tpu.matmul %0, %1, %cst {dimension_numbers = #tpu.dot_dimension_numbers<[1], [0], [0], [1], [0, 0, 1, 1], [], []>} : vector<16x100xbf16>, vector<100x32xbf16>, vector<16x32xf32> -> vector<16x32xf32>
    %3 = vector.shape_cast %2 : vector<16x32xf32> to vector<2x8x32xf32>
    %c0_3 = arith.constant 0 : index
    %c0_4 = arith.constant 0 : index
    %4 = vector.load %arg2[%c0_3, %c0_4] : memref<2x32xf32, #tpu.memory_space<vmem>>, vector<2x32xf32>
    %5 = vector.shape_cast %4 : vector<2x32xf32> to vector<2x1x32xf32>
    %6 = vector.broadcast %5 : vector<2x1x32xf32> to vector<2x8x32xf32>
    %7 = arith.addf %3, %6 : vector<2x8x32xf32>
    %cst_5 = arith.constant 0.000000e+00 : f32
    %8 = vector.broadcast %cst_5 : f32 to vector<2x8x32xf32>
    %9 = arith.maximumf %7, %8 : vector<2x8x32xf32>
    %c0_6 = arith.constant 0 : index
    %c0_7 = arith.constant 0 : index
    %10 = vector.load %arg5[%c0_6, %c0_7] : memref<1x32xf32, #tpu.memory_space<vmem>>, vector<1x32xf32>
    %11 = vector.shape_cast %10 : vector<1x32xf32> to vector<1x1x32xf32>
    %12 = vector.broadcast %11 : vector<1x1x32xf32> to vector<2x8x32xf32>
    %13 = arith.mulf %9, %12 : vector<2x8x32xf32>
    %cst_8 = arith.constant dense<0.000000e+00> : vector<2x8xf32>
    %14 = vector.multi_reduction <add>, %13, %cst_8 [2] : vector<2x8x32xf32> to vector<2x8xf32>
    %c0_9 = arith.constant 0 : index
    %c0_10 = arith.constant 0 : index
    %15 = vector.load %arg3[%c0_9, %c0_10] : memref<2x8xf32, #tpu.memory_space<vmem>>, vector<2x8xf32>
    %16 = arith.addf %14, %15 : vector<2x8xf32>
    %cst_11 = arith.constant dense<0xFF800000> : vector<2xf32>
    %17 = vector.multi_reduction <maximumf>, %16, %cst_11 [1] : vector<2x8xf32> to vector<2xf32>
    %18 = vector.shape_cast %17 : vector<2xf32> to vector<2x1xf32>
    %19 = vector.broadcast %18 : vector<2x1xf32> to vector<2x8xf32>
    %20 = arith.subf %16, %19 : vector<2x8xf32>
    %21 = math.exp %20 : vector<2x8xf32>
    %cst_12 = arith.constant dense<0.000000e+00> : vector<2xf32>
    %22 = vector.multi_reduction <add>, %21, %cst_12 [1] : vector<2x8xf32> to vector<2xf32>
    %23 = vector.shape_cast %22 : vector<2xf32> to vector<2x1xf32>
    %24 = tpu.reciprocal %23 {approx = true} : vector<2x1xf32> -> vector<2x1xf32>
    %25 = vector.broadcast %24 : vector<2x1xf32> to vector<2x8xf32>
    %26 = arith.mulf %21, %25 : vector<2x8xf32>
    %27 = arith.extf %0 : vector<16x100xbf16> to vector<16x100xf32>
    %28 = vector.shape_cast %27 : vector<16x100xf32> to vector<2x8x100xf32>
    %29 = vector.shape_cast %26 : vector<2x8xf32> to vector<2x8x1xf32>
    %30 = vector.broadcast %29 : vector<2x8x1xf32> to vector<2x8x100xf32>
    %31 = arith.mulf %28, %30 : vector<2x8x100xf32>
    %cst_13 = arith.constant dense<0.000000e+00> : vector<2x100xf32>
    %32 = vector.multi_reduction <add>, %31, %cst_13 [1] : vector<2x8x100xf32> to vector<2x100xf32>
    %c0_14 = arith.constant 0 : index
    %c0_15 = arith.constant 0 : index
    %33 = vector.load %arg6[%c0_14, %c0_15] : memref<2x100xf32, #tpu.memory_space<vmem>>, vector<2x100xf32>
    tpu.vector_store %arg6[%c0_14, %c0_15], %32 {strides = array<i32>} : memref<2x100xf32, #tpu.memory_space<vmem>>, vector<2x100xf32>,
    return
  }
  func.func @transform_0(%arg0: i32) -> (i32, i32) {
    %c0_i32 = arith.constant 0 : i32
    %c0_i32_0 = arith.constant 0 : i32
    return %arg0, %c0_i32 : i32, i32
  }
  func.func @transform_1(%arg0: i32) -> (i32, i32) {
    %c0_i32 = arith.constant 0 : i32
    %c0_i32_0 = arith.constant 0 : i32
    return %arg0, %c0_i32 : i32, i32
  }
  func.func @transform_2(%arg0: i32) -> (i32, i32) {
    %c0_i32 = arith.constant 0 : i32
    %c0_i32_0 = arith.constant 0 : i32
    return %arg0, %c0_i32 : i32, i32
  }
  func.func @transform_3(%arg0: i32) -> (i32, i32) {
    %c0_i32 = arith.constant 0 : i32
    %c0_i32_0 = arith.constant 0 : i32
    %c0_i32_1 = arith.constant 0 : i32
    return %c0_i32, %c0_i32_0 : i32, i32
  }
  func.func @transform_4(%arg0: i32) -> (i32, i32) {
    %c0_i32 = arith.constant 0 : i32
    %c0_i32_0 = arith.constant 0 : i32
    %c0_i32_1 = arith.constant 0 : i32
    return %c0_i32, %c0_i32_0 : i32, i32
  }
  func.func @transform_5(%arg0: i32) -> (i32, i32) {
    %c0_i32 = arith.constant 0 : i32
    %c0_i32_0 = arith.constant 0 : i32
    return %arg0, %c0_i32 : i32, i32
  }
}

</mosaic_0001>

<llo_original>
// kernel: tpu_custom_call.1
$region0: #{tpu_custom_call.1}
  #allocation0 [shape = 'u32[]', space=smem, size = 0x4, offset = 0x4, fixed_abs, tag = 'smem constant byte address 0x4 - core index']
  #allocation1 [shape = 'u32[144,128]{1,0:T(1,128)}', space=vmem, size = 0x12000, scoped, tag = 'internal scratch']
  %s0 = inlined_call_operand.vmem [shape: bf16[16,100], index: 0, kind: input, shape index: {}]
  %s1 = inlined_call_operand.vmem [shape: f32[2,32], index: 1, kind: input, shape index: {}]
  %s2 = inlined_call_operand.vmem [shape: f32[2,8], index: 2, kind: input, shape index: {}]
  %s3 = inlined_call_operand.vmem [shape: bf16[100,32], index: 3, kind: input, shape index: {}]
  %s4 = inlined_call_operand.vmem [shape: f32[1,32], index: 4, kind: input, shape index: {}]
  %s5 = inlined_call_operand.hbm [shape: f32[2,100], index: 5, kind: output, shape index: {}]
  %s6 = sld [smem:[#allocation0]]
  $region30: #{tpu_custom_call.1} parent=0
    _
  %s8 = ssub.s32 1, %s6
  %s9 = scalar_select 0, %s8, %s6
  $region1: #{tpu_custom_call.1} parent=0
    #allocation2 [shape = 'u8[1024]{0}', space=vmem, size = 0x400, scoped, tag = 'output window, operand 0, single buffered']
    #allocation3 [shape = 's32[1]{0}', space=sflag, size = 0x4, scoped, tag = 'scoped memory for tpu_custom_call.1']
    %10 = vsyncpa [#allocation3], 0
    // Predicated region
    $region2: #{tpu_custom_call.1} parent=1 // pred_check
      _
    $region3: #{tpu_custom_call.1} parent=1 // pred_check_branch
      %12 = sbr.rel (0) target = $region5
    $region4: #{tpu_custom_call.1} parent=1 // pred_region
      _
    $region5: #{tpu_custom_call.1} parent=1 // pred_fallthru
      _
    // Predicated region
    $region6: #{tpu_custom_call.1} parent=1 // pred_check
      _
    $region7: #{tpu_custom_call.1} parent=1 // pred_check_branch
      %14 = sbr.rel (0) target = $region9
    $region8: #{tpu_custom_call.1} parent=1 // pred_region
      _
    $region9: #{tpu_custom_call.1} parent=1 // pred_fallthru
      _
    // Predicated region
    $region10: #{tpu_custom_call.1} parent=1 // pred_check
      _
    $region11: #{tpu_custom_call.1} parent=1 // pred_check_branch
      %16 = sbr.rel (0) target = $region13
    $region12: #{tpu_custom_call.1} parent=1 // pred_region
      _
    $region13: #{tpu_custom_call.1} parent=1 // pred_fallthru
      _
    // Predicated region
    $region14: #{tpu_custom_call.1} parent=1 // pred_check
      _
    $region15: #{tpu_custom_call.1} parent=1 // pred_check_branch
      %18 = sbr.rel (0) target = $region17
    $region16: #{tpu_custom_call.1} parent=1 // pred_region
      _
    $region17: #{tpu_custom_call.1} parent=1 // pred_fallthru
      _
    // Predicated region
    $region18: #{tpu_custom_call.1} parent=1 // pred_check
      _
    $region19: #{tpu_custom_call.1} parent=1 // pred_check_branch
      %20 = sbr.rel (0) target = $region21
    $region20: #{tpu_custom_call.1} parent=1 // pred_region
      _
    $region21: #{tpu_custom_call.1} parent=1 // pred_fallthru
      _
    %v22 = vld [vmem:[%s0] sm:$0xf]
    %v23 = vld [vmem:[%s0 + $0x4] sm:$0xf]
    %v24 = vld [vmem:[%s3] sm:$0xf]
    %v25 = vld [vmem:[%s3 + $0x4] sm:$0xf]
    %v26 = vld [vmem:[%s3 + $0x8] sm:$0xf]
    %v27 = vld [vmem:[%s3 + $0xc] sm:$0xf]
    %v28 = vld [vmem:[%s3 + $0x10] sm:$0xf]
    %v29 = vld [vmem:[%s3 + $0x14] sm:$0xf]
    %v30 = vld [vmem:[%s3 + $0x18] sm:$0xf]
    %v31 = vld [vmem:[%s3 + $0x1c] sm:$0xf]
    %v32 = vld [vmem:[%s3 + $0x20] sm:$0xf]
    %v33 = vld [vmem:[%s3 + $0x24] sm:$0xf]
    %v34 = vld [vmem:[%s3 + $0x28] sm:$0xf]
    %v35 = vld [vmem:[%s3 + $0x2c] sm:$0xf]
    %v36 = vld [vmem:[%s3 + $0x30] sm:$0x3]
    %v39 = vunpack.c.l.b16 %v22
    %v40 = vunpack.c.l.b16 %v23
    %v41 = vpack.c.b16 %v40, %v39
    %v55 = vunpack.c.l.b16 %v24
    %v56 = vunpack.c.l.b16 %v25
    %v57 = vunpack.c.l.b16 %v26
    %v58 = vunpack.c.l.b16 %v27
    %v59 = vunpack.c.l.b16 %v28
    %v60 = vunpack.c.l.b16 %v29
    %v61 = vunpack.c.l.b16 %v30
    %v62 = vunpack.c.l.b16 %v31
    %v63 = vunpack.c.l.b16 %v32
    %v64 = vunpack.c.l.b16 %v33
    %v65 = vunpack.c.l.b16 %v34
    %v66 = vunpack.c.l.b16 %v35
    %v67 = vunpack.c.l.b16 %v36
    %v68 = vpack.c.b16 %v56, %v55
    %v69 = vpack.c.b16 %v58, %v57
    %v70 = vpack.c.b16 %v60, %v59
    %v71 = vpack.c.b16 %v62, %v61
    %v72 = vpack.c.b16 %v64, %v63
    %v73 = vpack.c.b16 %v66, %v65
    %v74 = vpack.c.b16 %v67, %v67
    %vm81 = vcmask 818176
    %v83 = vsel %vm81, %v41, 0
    %vm85 = vcmask 1041408
    %v87 = vsel %vm85, %v74, 0
    %89 = vmatprep.subr.bf16.mxu0 0
    %90 = vmatpush1.bf16.msra.mxu0 %v68
    %91 = vmatprep.subr.bf16.mxu0 0
    %92 = vmatpush1.bf16.msra.mxu0 %v69
    %93 = vmatprep.subr.bf16.mxu0 0
    %94 = vmatpush1.bf16.msra.mxu0 %v70
    %95 = vmatprep.subr.bf16.mxu0 0
    %96 = vmatpush1.bf16.msra.mxu0 %v71
    %97 = vmatprep.subr.bf16.mxu0 0
    %98 = vmatpush1.bf16.msra.mxu0 %v72
    %99 = vmatprep.subr.bf16.mxu0 0
    %100 = vmatpush1.bf16.msra.mxu0 %v73
    %101 = vmatprep.subr.bf16.mxu0 0
    %102 = vmatpush1.bf16.msra.mxu0 %v87
    %103 = vmatprep.subr.bf16.mxu0 0
    %104 = vmatpush1.bf16.msra.mxu0 0
    %105 = vmatprep.subr.bf16.mxu0 0
    %106 = vmatpush1.bf16.msra.mxu0 0
    %107 = vmatprep.subr.bf16.mxu0 0
    %108 = vmatpush1.bf16.msra.mxu0 0
    %109 = vmatprep.subr.bf16.mxu0 0
    %110 = vmatpush1.bf16.msra.mxu0 0
    %111 = vmatprep.subr.bf16.mxu0 0
    %112 = vmatpush1.bf16.msra.mxu0 0
    %113 = vmatprep.subr.bf16.mxu0 0
    %114 = vmatpush1.bf16.msra.mxu0 0
    %115 = vmatprep.subr.bf16.mxu0 0
    %116 = vmatpush1.bf16.msra.mxu0 0
    %117 = vmatprep.subr.bf16.mxu0 0
    %118 = vmatpush1.bf16.msra.mxu0 0
    %119 = vmatprep.subr.bf16.mxu0 0
    %120 = vmatpush1.bf16.msra.mxu0 0
    %121 = vmatprep.mubr.bf16.mxu0 0
    %122 = vmatmul.mubr.bf16.gmra.mrb[0].mxu0 %v83
    %v123 = vpop.f32.mrb[0].mxu0
    %v124 = vadd.f32 0.0, %v123
    %v125 = vpop.f32.mrb[0].mxu0
    %v126 = vpop.f32.mrb[0].mxu0
    %v127 = vadd.f32 0.0, %v126
    %v128 = vpop.f32.mrb[0].mxu0
    %129 = vdwg.mxu0
    %v130 = vld [vmem:[%s1] sm:$0x3]
    %v133 = vunpack.c.l.s4 1966171168
    %v134 = vunpack.c.0.s8 %v133
    %v135 = vlaneseq
    %v136 = vshrl.u32 %v135, 7
    %v137 = vsub.s32 %v134, %v136
    %v138 = vrot.slane %v130, %v137
    %v139 = vcombine.high %v138, %v138
    %v141 = vunpack.c.l.s4 1966171168
    %v142 = vunpack.c.0.s8 %v141
    %v143 = vlaneseq
    %v144 = vshrl.u32 %v143, 7
    %v145 = vsub.s32 %v142, %v144
    %v146 = vrot.slane %v138, %v145
    %v148 = vunpack.c.l.s4 1966171168
    %v149 = vunpack.c.0.s8 %v148
    %v150 = vlaneseq
    %v151 = vshrl.u32 %v150, 7
    %v152 = vsub.s32 %v149, %v151
    %v153 = vrot.slane %v139, %v152
    %v154 = vlaneseq
    %v155 = vshrl.u32 %v154, 7
    %v156 = vsub.s32 0, %v155
    %v157 = vrot.slane %v146, %v156
    %v158 = vlaneseq
    %v159 = vshrl.u32 %v158, 7
    %v160 = vsub.s32 0, %v159
    %v161 = vrot.slane %v153, %v160
    %v164 = vadd.f32 %v124, %v157
    %v165 = vadd.f32 %v127, %v161
    %v166 = vmax.f32 %v164, 0.0
    %v167 = vmax.f32 %v165, 0.0
    %v168 = vld [vmem:[%s4] sm:$0x1]
    %v170 = vlaneseq
    %v171 = vshrl.u32 %v170, 7
    %v172 = vsub.s32 0, %v171
    %v173 = vrot.slane %v168, %v172
    %v175 = vmul.f32 %v166, %v173
    %v176 = vmul.f32 %v167, %v173
    %vm177 = vcmask 261120
    %v178 = vsel %vm177, %v175, 0.0
    %179 = vadd.xlane.f32.xlu0 %v178
    %v180 = vpop.xlane.xlu0 %179
    %v181 = vsel %vm177, %v176, 0.0
    %182 = vadd.xlane.f32.xlu0 %v181
    %v183 = vpop.xlane.xlu0 %182
    %v184 = vld [vmem:[%s2] sm:$0x3]
    %v186 = vlaneseq
    %v187 = vshrl.u32 %v186, 7
    %v188 = vsub.s32 0, %v187
    %v189 = vrot.slane %v184, %v188
    %191 = vbcast.lane.b32.xlu0 %v189, 256
    %v192 = vpop.permute.xlu0 %191
    %v193 = vlaneseq
    %v194 = vshrl.u32 %v193, 7
    %v195 = vsub.s32 1, %v194
    %v196 = vrot.slane %v184, %v195
    %198 = vbcast.lane.b32.xlu0 %v196, 256
    %v199 = vpop.permute.xlu0 %198
    %v202 = vadd.f32 %v180, %v192
    %v203 = vadd.f32 %v183, %v199
    %206 = vset.pattern.permute.xlu0 0
    %207 = vperm.xlu0 %206, %v202
    %v208 = vpop.permute.xlu0 %207
    %209 = vset.pattern.permute.xlu0 0
    %210 = vperm.xlu0 %209, %v203
    %v211 = vpop.permute.xlu0 %210
    %v212 = vlaneseq
    %v213 = vand.u32 %v212, 127
    %v214 = vlaneseq
    %v215 = vshrl.u32 %v214, 7
    %v216 = vsub.s32 %v213, %v215
    %v217 = vrot.slane %v208, %v216
    %v218 = vlaneseq
    %v219 = vshrl.u32 %v218, 7
    %v220 = vsub.s32 %v213, %v219
    %v221 = vrot.slane %v211, %v220
    %vm222 = vcmask 1041409
    %v223 = vsel %vm222, %v221, %v217
    %vm225 = vcmask 58368
    %v226 = vsel %vm225, %v223, -inf
    %227 = vmax.xlane.f32.xlu0 %v226
    %v228 = vpop.xlane.xlu0 %227
    %v230 = vlaneseq
    %v231 = vshrl.u32 %v230, 7
    %v232 = vsub.s32 0, %v231
    %v233 = vrot.slane %v228, %v232
    %v234 = vlaneseq
    %v235 = vshrl.u32 %v234, 7
    %v236 = vsub.s32 1, %v235
    %v237 = vrot.slane %v228, %v236
    %v240 = vsub.f32 %v202, %v233
    %v241 = vsub.f32 %v203, %v237
    %v242 = vmul.f32 %v240, 1.442695
    %v243 = vpow.pop %v242
    %v244 = vmul.f32 %v241, 1.442695
    %v245 = vpow.pop %v244
    %248 = vset.pattern.permute.xlu0 0
    %249 = vperm.xlu0 %248, %v243
    %v250 = vpop.permute.xlu0 %249
    %251 = vset.pattern.permute.xlu0 0
    %252 = vperm.xlu0 %251, %v245
    %v253 = vpop.permute.xlu0 %252
    %v254 = vlaneseq
    %v255 = vshrl.u32 %v254, 7
    %v256 = vsub.s32 %v213, %v255
    %v257 = vrot.slane %v250, %v256
    %v258 = vlaneseq
    %v259 = vshrl.u32 %v258, 7
    %v260 = vsub.s32 %v213, %v259
    %v261 = vrot.slane %v253, %v260
    %v262 = vsel %vm222, %v261, %v257
    %v264 = vsel %vm225, %v262, 0.0
    %265 = vadd.xlane.f32.xlu0 %v264
    %v266 = vpop.xlane.xlu0 %265
    %v267 = vrcp.pop %v266
    %v269 = vlaneseq
    %v270 = vshrl.u32 %v269, 7
    %v271 = vsub.s32 0, %v270
    %v272 = vrot.slane %v267, %v271
    %v273 = vlaneseq
    %v274 = vshrl.u32 %v273, 7
    %v275 = vsub.s32 1, %v274
    %v276 = vrot.slane %v267, %v275
    %v279 = vmul.f32 %v243, %v272
    %v280 = vmul.f32 %v245, %v276
    %v281 = vunpack.c.l.bf16 %v22
    %v282 = vunpack.c.l.bf16 %v23
    %284 = vset.pattern.permute.xlu0 0
    %285 = vperm.xlu0 %284, %v279
    %v286 = vpop.permute.xlu0 %285
    %289 = vset.pattern.permute.xlu0 0
    %290 = vperm.xlu0 %289, %v280
    %v291 = vpop.permute.xlu0 %290
    %v293 = vmul.f32 %v281, %v286
    %v294 = vmul.f32 %v282, %v291
    %v295 = vsel %vm81, %v293, 0.0
    %v296 = vrot.slane %v295, 4
    %v297 = vadd.f32 %v295, %v296
    %v298 = vrot.slane %v297, 2
    %v299 = vadd.f32 %v297, %v298
    %v300 = vrot.slane %v299, 1
    %v301 = vadd.f32 %v299, %v300
    %v302 = vsel %vm81, %v294, 0.0
    %v303 = vrot.slane %v302, 4
    %v304 = vadd.f32 %v302, %v303
    %v305 = vrot.slane %v304, 2
    %v306 = vadd.f32 %v304, %v305
    %v307 = vrot.slane %v306, 1
    %v308 = vadd.f32 %v306, %v307
    %v311 = vsel %vm222, %v308, %v301
    %vm313 = vcmask 812032
    %314 = vst.msk [vmem:[#allocation2] sm:$0x3] %vm313, %v311
    // Predicated region
    $region22: #{tpu_custom_call.1} parent=1 // pred_check
      _
    $region23: #{tpu_custom_call.1} parent=1 // pred_check_branch
      %316 = sbr.rel (0) target = $region25
    $region24: #{tpu_custom_call.1} parent=1 // pred_region
      %s318 = ssub.s32 32, 32
      %319 = vsyncadd [#allocation3], %s318
      %s321 = sshll.u32 [#allocation2], 4
      %s322 = int_to_ptr.vmem [resolvable:$true] %s321
      %324 = dma.vmem_to_hbm [thread:$0]  %s322, 32, %s5, [#allocation3]
    $region25: #{tpu_custom_call.1} parent=1 // pred_fallthru
      _
    // Predicated region
    $region26: #{tpu_custom_call.1} parent=1 // pred_check
      _
    $region27: #{tpu_custom_call.1} parent=1 // pred_check_branch
      %326 = sbr.rel (0) target = $region29
    $region28: #{tpu_custom_call.1} parent=1 // pred_region
      %327 = dma.done [#allocation3], 32
    $region29: #{tpu_custom_call.1} parent=1 // pred_fallthru
      _
    %328 = vsyncpa [#allocation3], 1

</llo_original>
